<compile_context>
chip_gen: v6e
topology: v6e:2x2x1
jax: 0.10.0
libtpu: 0.0.40
codegen_flags: <defaults>
</compile_context>

<pallas_src>
import jax
import jax.numpy as jnp
from jax.experimental import pallas as pl
from jax.experimental.pallas import tpu as pltpu


def _round_up(x, m):
    return (x + m - 1) // m * m


def eac_kernel(x_ref, dep_ref, w1_ref, b1_ref, w2_ref, b2_ref, o_ref):
    """One (stage, N-tile) grid step.

    x_ref  : (TN, E+1) bf16  -- unmasked features; column E is the selector
    dep_ref: (1, E)    f32   -- per-feature depend category (-1 => always valid)
    w1_ref : (E, H) bf16, b1_ref : (1, H) f32
    w2_ref : (H, F) bf16, b2_ref : (1, F) f32
    o_ref  : (TN, F) out dtype
    """
    E = dep_ref.shape[-1]

    # Rebuild the xtrans validity mask in-kernel (VPU work, free under DMA/vst):
    # column e is valid iff depend[e] < 0 (the selector's own one-hot block)
    # or the row's selector category == depend[e].  Category ids are small
    # exact integers, so the float equality compare is exact.
    dep = dep_ref[...]                                   # (1, E)  f32
    sel = x_ref[:, E:].astype(jnp.float32)               # (TN, 1) f32
    valid = jnp.logical_or(dep < 0.0, sel == dep)        # (TN, E) bool

    xv = x_ref[:, :E]                                    # (TN, E) bf16
    x = jnp.where(valid, xv, jnp.zeros_like(xv))         # bit-select, bf16

    # hidden Linear: bf16 operands, f32 accumulate; bias add + ReLU in f32.
    h = jnp.dot(x, w1_ref[...], preferred_element_type=jnp.float32) + b1_ref[...]
    h = jnp.maximum(h, 0.0)

    # output Linear; store directly at width F (no lane padding, no wrapper
    # F-slice).  Cast to the output dtype (f32 or bf16) only at the store.
    o = jnp.dot(h.astype(jnp.bfloat16), w2_ref[...],
                preferred_element_type=jnp.float32) + b2_ref[...]
    o_ref[...] = o.astype(o_ref.dtype)


def _eac_pallas(x, dep, w1, b1, w2, b2, *, tn, out_dtype):
    S, Np, E1 = x.shape
    E = dep.shape[-1]
    H = w1.shape[-1]
    F = w2.shape[-1]
    assert Np % tn == 0
    n_tiles = Np // tn
    sq = pl.Squeezed()

    return pl.pallas_call(
        eac_kernel,
        out_shape=jax.ShapeDtypeStruct((S, Np, F), out_dtype),
        grid_spec=pltpu.PrefetchScalarGridSpec(
            num_scalar_prefetch=0,
            # NOTE: keep S as the OUTER grid axis.  Weight/bias block indices
            # depend only on s, so Pallas skips re-DMA'ing them across the
            # inner N-tile axis.  Do NOT swap to (n_tiles, S).
            grid=(S, n_tiles),
            in_specs=[
                pl.BlockSpec((sq, tn, E1), lambda s, n: (s, n, 0)),  # X (+sel)
                pl.BlockSpec((sq, 1, E),   lambda s, n: (s, 0, 0)),  # depend
                pl.BlockSpec((sq, E, H),   lambda s, n: (s, 0, 0)),  # W1
                pl.BlockSpec((sq, 1, H),   lambda s, n: (s, 0, 0)),  # b1
                pl.BlockSpec((sq, H, F),   lambda s, n: (s, 0, 0)),  # W2
                pl.BlockSpec((sq, 1, F),   lambda s, n: (s, 0, 0)),  # b2
            ],
            out_specs=pl.BlockSpec((sq, tn, F), lambda s, n: (s, n, 0)),
        ),
        compiler_params=pltpu.CompilerParams(
            dimension_semantics=("parallel", "parallel"),
            # Actual per-step VMEM is only a few MiB even at tn=4096; 48 MiB
            # leaves headroom on v7x (64 MiB physical per TC) and is trivially
            # safe on v5e/v6e (128 MiB physical).
            vmem_limit_bytes=48 * 1024 * 1024,
        ),
    )(x, dep, w1, b1, w2, b2)


def eac_forward(x_aug, depend, w1, b1, w2, b2, *, tile_n=2048,
                out_dtype=jnp.float32):
    """Wrapper: balanced batch tiling + Pallas call.

    x_aug : [S, N, E+1]  (bf16 preferred; selector folded in as last column)
    depend: [S, E]
    Returns [S, N, F] in `out_dtype`.
    """
    S, N, _ = x_aug.shape

    if x_aug.dtype != jnp.bfloat16:
        x_aug = x_aug.astype(jnp.bfloat16)

    # Balanced tiling: choose the number of tiles first, then the tile size,
    # so padding waste is < 16 rows per stage.
    n_tiles = pl.cdiv(N, tile_n)
    # v7x has 2 TensorCores: keep at least 2 parallel grid items.
    if S * n_tiles < 2 and N >= 32:
        n_tiles = 2
    TN = _round_up(pl.cdiv(N, n_tiles), 16)   # bf16 sublane packing: mult of 16
    Np = n_tiles * TN

    xp = x_aug if Np == N else jnp.pad(x_aug, ((0, 0), (0, Np - N), (0, 0)))
    dep = depend[:, None, :].astype(jnp.float32)

    out = _eac_pallas(xp, dep,
                      w1.astype(jnp.bfloat16), b1.astype(jnp.float32),
                      w2.astype(jnp.bfloat16), b2.astype(jnp.float32),
                      tn=TN, out_dtype=out_dtype)
    # No F-slice ever; N-slice only when batch padding was actually needed.
    # Padded rows (if any) contain garbage (bias propagates through ReLU).
    return out if Np == N else out[:, :N, :]


def build_stage_features(Xc_s, Xe_s, num_uniqs, cont_depends, enum_depends,
                         selector_col=0):
    """Plain-JAX glue replicating EmbeddingAlignmentCell.xtrans structure.

    Returns (x_aug [N, E+1] bf16: unmasked features ++ selector column,
             depend [E] f32).
    depend[e] = -1 means "always valid" (the selector's own one-hot block);
    otherwise column e is valid iff selector == depend[e].
    """
    selector = Xe_s[:, selector_col].astype(jnp.float32)             # [N]
    oh_blocks = []
    dep_entries = [float(d) for d in cont_depends]                   # cont cols
    for j, k in enumerate(num_uniqs):
        oh = (Xe_s[:, j:j + 1] == jnp.arange(k)[None, :]).astype(jnp.float32)
        oh_blocks.append(oh)                                         # [N, k]
        if j == selector_col:
            dep_entries += [-1.0] * k            # selector block: always valid
        else:
            dep_entries += [float(enum_depends[j])] * k
    x_aug = jnp.concatenate([Xc_s] + oh_blocks + [selector[:, None]], axis=1)
    depend = jnp.array(dep_entries, jnp.float32)                     # [E]
    return x_aug.astype(jnp.bfloat16), depend                        # [N, E+1]


if __name__ == "__main__":
    S = 2                      # number of stages
    N = 32                     # batch size (multiple of 16 -> no pad, no slice)
    C = 2                      # continuous params per stage
    num_uniqs = [3, 4]         # categorical cardinalities (col 0 = stage selector)
    Ne = len(num_uniqs)
    E = C + sum(num_uniqs)     # eff_dim = 9
    H = 32                     # num_hiddens
    F = 64                     # out_features
    cont_depends = [0, 1]      # cont param i valid iff selector == cont_depends[i]
    enum_depends = [None, 2]   # enum col 1 valid iff selector == 2

    key = jax.random.PRNGKey(0)
    kc, ke, kw = jax.random.split(key, 3)

    # Deterministic synthetic inputs (full space: S stages concatenated).
    Xc_full = jax.random.normal(kc, (N, S * C), dtype=jnp.float32)
    cols = []
    for s in range(S):
        for j, k in enumerate(num_uniqs):
            ke, sub = jax.random.split(ke)
            cols.append(jax.random.randint(sub, (N,), 0, k, dtype=jnp.int32))
    Xe_full = jnp.stack(cols, axis=1)                                # [N, S*Ne]

    # Per-stage weights (share_weights=False), PyTorch-style uniform init.
    def init_linear(k, fan_in, fan_out):
        bound = 1.0 / float(fan_in) ** 0.5
        kw_, kb_ = jax.random.split(k)
        W = jax.random.uniform(kw_, (fan_in, fan_out), minval=-bound,
                               maxval=bound, dtype=jnp.float32)
        b = jax.random.uniform(kb_, (1, fan_out), minval=-bound,
                               maxval=bound, dtype=jnp.float32)
        return W, b

    W1s, b1s, W2s, b2s = [], [], [], []
    for s in range(S):
        kw, k1, k2 = jax.random.split(kw, 3)
        W1_, b1_ = init_linear(k1, E, H)
        W2_, b2_ = init_linear(k2, H, F)
        W1s.append(W1_); b1s.append(b1_); W2s.append(W2_); b2s.append(b2_)
    W1 = jnp.stack(W1s); b1 = jnp.stack(b1s)
    W2 = jnp.stack(W2s); b2 = jnp.stack(b2s)

    # Per-stage xtrans preprocessing (glue), stacked over stages (bf16).
    xs, dp = [], []
    for s in range(S):
        Xc_s = Xc_full[:, s * C:(s + 1) * C]
        Xe_s = Xe_full[:, s * Ne:(s + 1) * Ne]
        xa, dep = build_stage_features(Xc_s, Xe_s, num_uniqs,
                                       cont_depends, enum_depends)
        xs.append(xa); dp.append(dep)
    x_aug = jnp.stack(xs)                                            # [S, N, E+1]
    depend = jnp.stack(dp)                                           # [S, E]

    # Run kernel: default f32 output (module semantics).
    out = eac_forward(x_aug, depend, W1, b1, W2, b2)
    out = jax.block_until_ready(out)
    assert out.shape == (S, N, F), out.shape

    # Also exercise the bf16-output fast path (halved writeback bytes).
    out_bf16 = eac_forward(x_aug, depend, W1, b1, W2, b2,
                           out_dtype=jnp.bfloat16)
    out_bf16 = jax.block_until_ready(out_bf16)
    assert out_bf16.shape == (S, N, F) and out_bf16.dtype == jnp.bfloat16

    # Pure-JAX reference of the same forward (bf16 matmul operands, f32 accum).
    x_raw = x_aug[..., :E].astype(jnp.bfloat16)                      # [S, N, E]
    selector = x_aug[..., E].astype(jnp.float32)                     # [S, N]
    valid = jnp.logical_or(depend[:, None, :] < 0,
                           selector[:, :, None] == depend[:, None, :])
    x_eff = jnp.where(valid, x_raw, jnp.zeros_like(x_raw))
    h_ref = jnp.einsum("sne,seh->snh", x_eff, W1.astype(jnp.bfloat16),
                       preferred_element_type=jnp.float32) + b1
    h_ref = jnp.maximum(h_ref, 0.0)
    o_ref = jnp.einsum("snh,shf->snf", h_ref.astype(jnp.bfloat16),
                       W2.astype(jnp.bfloat16),
                       preferred_element_type=jnp.float32) + b2

    assert jnp.allclose(out, o_ref, atol=1e-3, rtol=1e-3), (
        float(jnp.max(jnp.abs(out - o_ref))))
    assert jnp.allclose(out_bf16.astype(jnp.float32), o_ref,
                        atol=5e-2, rtol=5e-2), (
        float(jnp.max(jnp.abs(out_bf16.astype(jnp.float32) - o_ref))))

    print("KERNEL_OK")
</pallas_src>

<mosaic_0001>
module attributes {stable_mosaic.version = 11 : i64} {
  func.func @eac_kernel(%arg0: i32, %arg1: i32, %arg2: memref<1x32x10xbf16, #tpu.memory_space<vmem>>, %arg3: memref<1x1x9xf32, #tpu.memory_space<vmem>>, %arg4: memref<1x9x32xbf16, #tpu.memory_space<vmem>>, %arg5: memref<1x1x32xf32, #tpu.memory_space<vmem>>, %arg6: memref<1x32x64xbf16, #tpu.memory_space<vmem>>, %arg7: memref<1x1x64xf32, #tpu.memory_space<vmem>>, %arg8: memref<1x32x64xf32, #tpu.memory_space<vmem>>) attributes {dimension_semantics = [#tpu.dimension_semantics<parallel>, #tpu.dimension_semantics<parallel>], iteration_bounds = array<i64: 2, 1>, scalar_prefetch = 0 : i64, scratch_operands = 0 : i64, tpu.core_type = #tpu.core_type<tc>, window_params = [{transform_indices = @transform_0, window_bounds = array<i64: 1, 32, 10>}, {transform_indices = @transform_1, window_bounds = array<i64: 1, 1, 9>}, {transform_indices = @transform_2, window_bounds = array<i64: 1, 9, 32>}, {transform_indices = @transform_3, window_bounds = array<i64: 1, 1, 32>}, {transform_indices = @transform_4, window_bounds = array<i64: 1, 32, 64>}, {transform_indices = @transform_5, window_bounds = array<i64: 1, 1, 64>}, {transform_indices = @transform_6, window_bounds = array<i64: 1, 32, 64>}]} {
    %c0 = arith.constant 0 : index
    %c0_0 = arith.constant 0 : index
    %c0_1 = arith.constant 0 : index
    %0 = vector.load %arg3[%c0, %c0_0, %c0_1] : memref<1x1x9xf32, #tpu.memory_space<vmem>>, vector<1x1x9xf32>
    %1 = vector.shape_cast %0 : vector<1x1x9xf32> to vector<1x9xf32>
    %c0_2 = arith.constant 0 : index
    %c0_3 = arith.constant 0 : index
    %c9 = arith.constant 9 : index
    %2 = vector.load %arg2[%c0_2, %c0_3, %c9] : memref<1x32x10xbf16, #tpu.memory_space<vmem>>, vector<1x32x1xbf16>
    %3 = vector.shape_cast %2 : vector<1x32x1xbf16> to vector<32x1xbf16>
    %4 = arith.extf %3 : vector<32x1xbf16> to vector<32x1xf32>
    %cst = arith.constant 0.000000e+00 : f32
    %5 = vector.broadcast %cst : f32 to vector<1x9xf32>
    %6 = arith.cmpf olt, %1, %5 : vector<1x9xf32>
    %7 = vector.broadcast %4 : vector<32x1xf32> to vector<32x9xf32>
    %8 = vector.broadcast %1 : vector<1x9xf32> to vector<32x9xf32>
    %9 = arith.cmpf oeq, %7, %8 : vector<32x9xf32>
    %10 = vector.broadcast %6 : vector<1x9xi1> to vector<32x9xi1>
    %11 = arith.ori %10, %9 : vector<32x9xi1>
    %c0_4 = arith.constant 0 : index
    %c0_5 = arith.constant 0 : index
    %c0_6 = arith.constant 0 : index
    %12 = vector.load %arg2[%c0_4, %c0_5, %c0_6] : memref<1x32x10xbf16, #tpu.memory_space<vmem>>, vector<1x32x9xbf16>
    %13 = vector.shape_cast %12 : vector<1x32x9xbf16> to vector<32x9xbf16>
    %cst_7 = arith.constant 0.000000e+00 : bf16
    %14 = vector.broadcast %cst_7 : bf16 to vector<32x9xbf16>
    %15 = arith.select %11, %13, %14 : vector<32x9xi1>, vector<32x9xbf16>
    %c0_8 = arith.constant 0 : index
    %c0_9 = arith.constant 0 : index
    %c0_10 = arith.constant 0 : index
    %16 = vector.load %arg4[%c0_8, %c0_9, %c0_10] : memref<1x9x32xbf16, #tpu.memory_space<vmem>>, vector<1x9x32xbf16>
    %17 = vector.shape_cast %16 : vector<1x9x32xbf16> to vector<9x32xbf16>
    %cst_11 = arith.constant dense<0.000000e+00> : vector<32x32xf32>
    %18 = tpu.matmul %15, %17, %cst_11 {dimension_numbers = #tpu.dot_dimension_numbers<[1], [0], [0], [1], [0, 0, 1, 1], [], []>} : vector<32x9xbf16>, vector<9x32xbf16>, vector<32x32xf32> -> vector<32x32xf32>
    %c0_12 = arith.constant 0 : index
    %c0_13 = arith.constant 0 : index
    %c0_14 = arith.constant 0 : index
    %19 = vector.load %arg5[%c0_12, %c0_13, %c0_14] : memref<1x1x32xf32, #tpu.memory_space<vmem>>, vector<1x1x32xf32>
    %20 = vector.shape_cast %19 : vector<1x1x32xf32> to vector<1x32xf32>
    %21 = vector.broadcast %20 : vector<1x32xf32> to vector<32x32xf32>
    %22 = arith.addf %18, %21 : vector<32x32xf32>
    %cst_15 = arith.constant 0.000000e+00 : f32
    %23 = vector.broadcast %cst_15 : f32 to vector<32x32xf32>
    %24 = arith.maximumf %22, %23 : vector<32x32xf32>
    %25 = arith.truncf %24 : vector<32x32xf32> to vector<32x32xbf16>
    %c0_16 = arith.constant 0 : index
    %c0_17 = arith.constant 0 : index
    %c0_18 = arith.constant 0 : index
    %26 = vector.load %arg6[%c0_16, %c0_17, %c0_18] : memref<1x32x64xbf16, #tpu.memory_space<vmem>>, vector<1x32x64xbf16>
    %27 = vector.shape_cast %26 : vector<1x32x64xbf16> to vector<32x64xbf16>
    %cst_19 = arith.constant dense<0.000000e+00> : vector<32x64xf32>
    %28 = tpu.matmul %25, %27, %cst_19 {dimension_numbers = #tpu.dot_dimension_numbers<[1], [0], [0], [1], [0, 0, 1, 1], [], []>} : vector<32x32xbf16>, vector<32x64xbf16>, vector<32x64xf32> -> vector<32x64xf32>
    %c0_20 = arith.constant 0 : index
    %c0_21 = arith.constant 0 : index
    %c0_22 = arith.constant 0 : index
    %29 = vector.load %arg7[%c0_20, %c0_21, %c0_22] : memref<1x1x64xf32, #tpu.memory_space<vmem>>, vector<1x1x64xf32>
    %30 = vector.shape_cast %29 : vector<1x1x64xf32> to vector<1x64xf32>
    %31 = vector.broadcast %30 : vector<1x64xf32> to vector<32x64xf32>
    %32 = arith.addf %28, %31 : vector<32x64xf32>
    %c0_23 = arith.constant 0 : index
    %c0_24 = arith.constant 0 : index
    %c0_25 = arith.constant 0 : index
    %33 = vector.load %arg8[%c0_23, %c0_24, %c0_25] : memref<1x32x64xf32, #tpu.memory_space<vmem>>, vector<1x32x64xf32>
    %34 = vector.shape_cast %33 : vector<1x32x64xf32> to vector<32x64xf32>
    %35 = vector.shape_cast %32 : vector<32x64xf32> to vector<1x32x64xf32>
    tpu.vector_store %arg8[%c0_23, %c0_24, %c0_25], %35 {strides = array<i32>} : memref<1x32x64xf32, #tpu.memory_space<vmem>>, vector<1x32x64xf32>,
    return
  }
  func.func @transform_0(%arg0: i32, %arg1: i32) -> (i32, i32, i32) {
    %c0_i32 = arith.constant 0 : i32
    %c0_i32_0 = arith.constant 0 : i32
    return %arg0, %arg1, %c0_i32 : i32, i32, i32
  }
  func.func @transform_1(%arg0: i32, %arg1: i32) -> (i32, i32, i32) {
    %c0_i32 = arith.constant 0 : i32
    %c0_i32_0 = arith.constant 0 : i32
    %c0_i32_1 = arith.constant 0 : i32
    return %arg0, %c0_i32, %c0_i32_0 : i32, i32, i32
  }
  func.func @transform_2(%arg0: i32, %arg1: i32) -> (i32, i32, i32) {
    %c0_i32 = arith.constant 0 : i32
    %c0_i32_0 = arith.constant 0 : i32
    %c0_i32_1 = arith.constant 0 : i32
    return %arg0, %c0_i32, %c0_i32_0 : i32, i32, i32
  }
  func.func @transform_3(%arg0: i32, %arg1: i32) -> (i32, i32, i32) {
    %c0_i32 = arith.constant 0 : i32
    %c0_i32_0 = arith.constant 0 : i32
    %c0_i32_1 = arith.constant 0 : i32
    return %arg0, %c0_i32, %c0_i32_0 : i32, i32, i32
  }
  func.func @transform_4(%arg0: i32, %arg1: i32) -> (i32, i32, i32) {
    %c0_i32 = arith.constant 0 : i32
    %c0_i32_0 = arith.constant 0 : i32
    %c0_i32_1 = arith.constant 0 : i32
    return %arg0, %c0_i32, %c0_i32_0 : i32, i32, i32
  }
  func.func @transform_5(%arg0: i32, %arg1: i32) -> (i32, i32, i32) {
    %c0_i32 = arith.constant 0 : i32
    %c0_i32_0 = arith.constant 0 : i32
    %c0_i32_1 = arith.constant 0 : i32
    return %arg0, %c0_i32, %c0_i32_0 : i32, i32, i32
  }
  func.func @transform_6(%arg0: i32, %arg1: i32) -> (i32, i32, i32) {
    %c0_i32 = arith.constant 0 : i32
    %c0_i32_0 = arith.constant 0 : i32
    return %arg0, %arg1, %c0_i32 : i32, i32, i32
  }
}

</mosaic_0001>

<llo_original>
// kernel: tpu_custom_call.1
$region0: #{tpu_custom_call.1}
  #allocation0 [shape = 'u32[]', space=smem, size = 0x4, offset = 0x4, fixed_abs, tag = 'smem constant byte address 0x4 - core index']
  #allocation1 [shape = 'u32[144,128]{1,0:T(1,128)}', space=vmem, size = 0x12000, scoped, tag = 'internal scratch']
  %s0 = inlined_call_operand.vmem [shape: bf16[2,32,10], index: 0, kind: input, shape index: {}]
  %s1 = inlined_call_operand.vmem [shape: f32[2,1,9], index: 1, kind: input, shape index: {}]
  %s2 = inlined_call_operand.vmem [shape: bf16[2,9,32], index: 2, kind: input, shape index: {}]
  %s3 = inlined_call_operand.vmem [shape: f32[2,1,32], index: 3, kind: input, shape index: {}]
  %s4 = inlined_call_operand.vmem [shape: bf16[2,32,64], index: 4, kind: input, shape index: {}]
  %s5 = inlined_call_operand.vmem [shape: f32[2,1,64], index: 5, kind: input, shape index: {}]
  %s6 = inlined_call_operand.hbm [shape: f32[2,32,64], index: 6, kind: output, shape index: {}]
  %s7 = sld [smem:[#allocation0]]
  $region57: #{tpu_custom_call.1} parent=0
    _
  %s9 = ssub.s32 1, %s7
  %s10 = scalar_select 0, %s9, %s7
  $region1: #{tpu_custom_call.1} parent=0
    #allocation2 [shape = 'u8[32768]{0}', space=vmem, size = 0x8000, scoped, tag = 'output window, operand 0']
    #allocation3 [shape = 's32[2]{0}', space=sflag, size = 0x8, scoped, tag = 'scoped memory for tpu_custom_call.1']
    %11 = vsyncpa [#allocation3], 0
    %s12 = scalar_lea.sflag [#allocation3], 1
    %13 = vsyncpa %s12, 0
    loop: start=0, step=1, limit=4
    $region2: #{tpu_custom_call.1} parent=1 // loop_pre_header
      _
    $region3: #{tpu_custom_call.1} parent=1 // loop_header
      %s15 = sphi 0, %s19
      %p16 = scmp.ge.s32.totalorder %s15, 4
      %s22 = sphi 0, %s34
      %s23 = sphi 0, %s30
      %s24 = sphi 0, %s22
      %s25 = sphi 0, %s23
      %s26 = sphi 0, %s24
      %s27 = sphi 0, %s25
      %s39 = sphi 0, %s41
      %s42 = sphi 0, %s39
      %s43 = sphi 0, %s42
      %s59 = sphi 0, %s43
      %s65 = sphi 0, %s67
      %s68 = sphi 0, %s65
      %s69 = sphi 0, %s68
      %s85 = sphi 0, %s69
      %s91 = sphi 0, %s93
      %s94 = sphi 0, %s91
      %s95 = sphi 0, %s94
      %s111 = sphi 0, %s95
      %s117 = sphi 0, %s119
      %s120 = sphi 0, %s117
      %s121 = sphi 0, %s120
      %s137 = sphi 0, %s121
      %s143 = sphi 0, %s145
      %s146 = sphi 0, %s143
      %s147 = sphi 0, %s146
      %s163 = sphi 0, %s147
      %s169 = sphi 0, %s171
      %s172 = sphi 0, %s169
      %s173 = sphi 0, %s172
      %s189 = sphi 0, %s173
      %s197 = sphi 0, %s199
      %s200 = sphi 0, %s197
      %s201 = sphi 0, %s200
      %s217 = sphi 0, %s201
    $region4: #{tpu_custom_call.1} parent=1 // loop_header_branch
      %18 = sbr.rel (%p16) target = $region8
    $region5: #{tpu_custom_call.1} parent=1 // loop_body
      %s20 = ssub.s32 %s15, 1
      %s21 = ssub.s32 %s15, 2
      %s28 = sadd.s32 1, %s23
      %p29 = scmp.ge.s32.totalorder %s28, 1
      %s30 = scalar_select %p29, 0, %s28
      %s31 = sadd.s32 1, %s22
      %s32 = scalar_select %p29, %s31, %s22
      %p33 = scmp.ge.s32.totalorder %s32, 2
      %s34 = scalar_select %p33, 0, %s32
      %s35 = ssub.s32 %s22, %s34
      %s36 = ssub.s32 %s23, %s30
      %s37 = sor.u32 %s35, %s36
      %p38 = scmp.eq.s32.totalorder %s37, 0
      %s40 = sadd.s32 %s39, 1
      %s41 = scalar_select %p38, %s39, %s40
      %p44 = pneg %p38
      %p45 = scmp.eq.s32.totalorder %s15, 1
      %p46 = por %p44, %p45
      %p47 = scmp.ne.s32.totalorder %s39, %s42
      %p48 = scmp.eq.s32.totalorder %s15, 0
      %p49 = por %p47, %p48
      %p50 = scmp.ne.s32.totalorder %s39, %s42
      %p51 = scmp.eq.s32.totalorder %s20, 1
      %p52 = por %p50, %p51
      %p53 = scmp.ne.s32.totalorder %s42, %s43
      %p54 = scmp.eq.s32.totalorder %s20, 0
      %p55 = por %p53, %p54
      %p56 = scmp.ne.s32.totalorder %s42, %s43
      %p57 = scmp.eq.s32.totalorder %s21, 1
      %p58 = por %p56, %p57
      %p60 = scmp.ne.s32.totalorder %s43, %s59
      %p61 = scmp.eq.s32.totalorder %s21, 0
      %p62 = por %p60, %p61
      %s63 = ssub.s32 %s22, %s34
      %p64 = scmp.eq.s32.totalorder %s63, 0
      %s66 = sadd.s32 %s65, 1
      %s67 = scalar_select %p64, %s65, %s66
      %p70 = pneg %p64
      %p71 = scmp.eq.s32.totalorder %s15, 1
      %p72 = por %p70, %p71
      %p73 = scmp.ne.s32.totalorder %s65, %s68
      %p74 = scmp.eq.s32.totalorder %s15, 0
      %p75 = por %p73, %p74
      %p76 = scmp.ne.s32.totalorder %s65, %s68
      %p77 = scmp.eq.s32.totalorder %s20, 1
      %p78 = por %p76, %p77
      %p79 = scmp.ne.s32.totalorder %s68, %s69
      %p80 = scmp.eq.s32.totalorder %s20, 0
      %p81 = por %p79, %p80
      %p82 = scmp.ne.s32.totalorder %s68, %s69
      %p83 = scmp.eq.s32.totalorder %s21, 1
      %p84 = por %p82, %p83
      %p86 = scmp.ne.s32.totalorder %s69, %s85
      %p87 = scmp.eq.s32.totalorder %s21, 0
      %p88 = por %p86, %p87
      %s89 = ssub.s32 %s22, %s34
      %p90 = scmp.eq.s32.totalorder %s89, 0
      %s92 = sadd.s32 %s91, 1
      %s93 = scalar_select %p90, %s91, %s92
      %p96 = pneg %p90
      %p97 = scmp.eq.s32.totalorder %s15, 1
      %p98 = por %p96, %p97
      %p99 = scmp.ne.s32.totalorder %s91, %s94
      %p100 = scmp.eq.s32.totalorder %s15, 0
      %p101 = por %p99, %p100
      %p102 = scmp.ne.s32.totalorder %s91, %s94
      %p103 = scmp.eq.s32.totalorder %s20, 1
      %p104 = por %p102, %p103
      %p105 = scmp.ne.s32.totalorder %s94, %s95
      %p106 = scmp.eq.s32.totalorder %s20, 0
      %p107 = por %p105, %p106
      %p108 = scmp.ne.s32.totalorder %s94, %s95
      %p109 = scmp.eq.s32.totalorder %s21, 1
      %p110 = por %p108, %p109
      %p112 = scmp.ne.s32.totalorder %s95, %s111
      %p113 = scmp.eq.s32.totalorder %s21, 0
      %p114 = por %p112, %p113
      %s115 = ssub.s32 %s22, %s34
      %p116 = scmp.eq.s32.totalorder %s115, 0
      %s118 = sadd.s32 %s117, 1
      %s119 = scalar_select %p116, %s117, %s118
      %p122 = pneg %p116
      %p123 = scmp.eq.s32.totalorder %s15, 1
      %p124 = por %p122, %p123
      %p125 = scmp.ne.s32.totalorder %s117, %s120
      %p126 = scmp.eq.s32.totalorder %s15, 0
      %p127 = por %p125, %p126
      %p128 = scmp.ne.s32.totalorder %s117, %s120
      %p129 = scmp.eq.s32.totalorder %s20, 1
      %p130 = por %p128, %p129
      %p131 = scmp.ne.s32.totalorder %s120, %s121
      %p132 = scmp.eq.s32.totalorder %s20, 0
      %p133 = por %p131, %p132
      %p134 = scmp.ne.s32.totalorder %s120, %s121
      %p135 = scmp.eq.s32.totalorder %s21, 1
      %p136 = por %p134, %p135
      %p138 = scmp.ne.s32.totalorder %s121, %s137
      %p139 = scmp.eq.s32.totalorder %s21, 0
      %p140 = por %p138, %p139
      %s141 = ssub.s32 %s22, %s34
      %p142 = scmp.eq.s32.totalorder %s141, 0
      %s144 = sadd.s32 %s143, 1
      %s145 = scalar_select %p142, %s143, %s144
      %p148 = pneg %p142
      %p149 = scmp.eq.s32.totalorder %s15, 1
      %p150 = por %p148, %p149
      %p151 = scmp.ne.s32.totalorder %s143, %s146
      %p152 = scmp.eq.s32.totalorder %s15, 0
      %p153 = por %p151, %p152
      %p154 = scmp.ne.s32.totalorder %s143, %s146
      %p155 = scmp.eq.s32.totalorder %s20, 1
      %p156 = por %p154, %p155
      %p157 = scmp.ne.s32.totalorder %s146, %s147
      %p158 = scmp.eq.s32.totalorder %s20, 0
      %p159 = por %p157, %p158
      %p160 = scmp.ne.s32.totalorder %s146, %s147
      %p161 = scmp.eq.s32.totalorder %s21, 1
      %p162 = por %p160, %p161
      %p164 = scmp.ne.s32.totalorder %s147, %s163
      %p165 = scmp.eq.s32.totalorder %s21, 0
      %p166 = por %p164, %p165
      %s167 = ssub.s32 %s22, %s34
      %p168 = scmp.eq.s32.totalorder %s167, 0
      %s170 = sadd.s32 %s169, 1
      %s171 = scalar_select %p168, %s169, %s170
      %p174 = pneg %p168
      %p175 = scmp.eq.s32.totalorder %s15, 1
      %p176 = por %p174, %p175
      %p177 = scmp.ne.s32.totalorder %s169, %s172
      %p178 = scmp.eq.s32.totalorder %s15, 0
      %p179 = por %p177, %p178
      %p180 = scmp.ne.s32.totalorder %s169, %s172
      %p181 = scmp.eq.s32.totalorder %s20, 1
      %p182 = por %p180, %p181
      %p183 = scmp.ne.s32.totalorder %s172, %s173
      %p184 = scmp.eq.s32.totalorder %s20, 0
      %p185 = por %p183, %p184
      %p186 = scmp.ne.s32.totalorder %s172, %s173
      %p187 = scmp.eq.s32.totalorder %s21, 1
      %p188 = por %p186, %p187
      %p190 = scmp.ne.s32.totalorder %s173, %s189
      %p191 = scmp.eq.s32.totalorder %s21, 0
      %p192 = por %p190, %p191
      %s193 = ssub.s32 %s22, %s34
      %s194 = ssub.s32 %s23, %s30
      %s195 = sor.u32 %s193, %s194
      %p196 = scmp.eq.s32.totalorder %s195, 0
      %s198 = sadd.s32 %s197, 1
      %s199 = scalar_select %p196, %s197, %s198
      %p202 = pneg %p196
      %p203 = scmp.eq.s32.totalorder %s15, 1
      %p204 = por %p202, %p203
      %p205 = scmp.ne.s32.totalorder %s197, %s200
      %p206 = scmp.eq.s32.totalorder %s15, 0
      %p207 = por %p205, %p206
      %p208 = scmp.ne.s32.totalorder %s197, %s200
      %p209 = scmp.eq.s32.totalorder %s20, 1
      %p210 = por %p208, %p209
      %p211 = scmp.ne.s32.totalorder %s200, %s201
      %p212 = scmp.eq.s32.totalorder %s20, 0
      %p213 = por %p211, %p212
      %p214 = scmp.ne.s32.totalorder %s200, %s201
      %p215 = scmp.eq.s32.totalorder %s21, 1
      %p216 = por %p214, %p215
      %p218 = scmp.ne.s32.totalorder %s201, %s217
      %p219 = scmp.eq.s32.totalorder %s21, 0
      %p220 = por %p218, %p219
      %p221 = scmp.le.s32.totalorder 1, %s15
      %p222 = scmp.lt.s32.totalorder %s15, 3
      %p223 = pnand %p221, %p222
      %p224 = pneg %p223
      // Predicated region
      $region9: #{tpu_custom_call.1} parent=5 // pred_check
        _
      $region10: #{tpu_custom_call.1} parent=5 // pred_check_branch
        %226 = sbr.rel (%p223) target = $region12
      $region11: #{tpu_custom_call.1} parent=5 // pred_region
        %s227 = ssub.s32 %s15, 1
      $region12: #{tpu_custom_call.1} parent=5 // pred_fallthru
        _
      %p228 = scmp.lt.s32.totalorder %s15, 2
      // Predicated region
      $region13: #{tpu_custom_call.1} parent=5 // pred_check
        %p229 = pneg %p228
      $region14: #{tpu_custom_call.1} parent=5 // pred_check_branch
        %231 = sbr.rel (%p229) target = $region16
      $region15: #{tpu_custom_call.1} parent=5 // pred_region
        // Predicated region
        $region17: #{tpu_custom_call.1} parent=15 // pred_check
          %p232 = pneg %p49
        $region18: #{tpu_custom_call.1} parent=15 // pred_check_branch
          %234 = sbr.rel (%p232) target = $region20
        $region19: #{tpu_custom_call.1} parent=15 // pred_region
          %s235 = smul.u32 4, %s23
          %p236 = scmp.lt.s32.totalorder %s22, 1
          %s237 = scalar_select %p236, %s22, 1
          %p238 = scmp.lt.s32.totalorder %s235, 3
          %s239 = scalar_select %p238, %s235, 3
          %s240 = smul.addr %s237, 4
          %s241 = sadd.s32 %s239, %s240
          %s242 = smul.addr %s241, 4
          %s243 = scalar_lea.vmem %s0, %s242
          %s244 = smul.u32 4, %s23
        $region20: #{tpu_custom_call.1} parent=15 // pred_fallthru
          _
        // Predicated region
        $region21: #{tpu_custom_call.1} parent=15 // pred_check
          %p245 = pneg %p75
        $region22: #{tpu_custom_call.1} parent=15 // pred_check_branch
          %247 = sbr.rel (%p245) target = $region24
        $region23: #{tpu_custom_call.1} parent=15 // pred_region
          %p248 = scmp.lt.s32.totalorder %s22, 1
          %s249 = scalar_select %p248, %s22, 1
          %s250 = scalar_lea.vmem %s1, %s249
        $region24: #{tpu_custom_call.1} parent=15 // pred_fallthru
          _
        // Predicated region
        $region25: #{tpu_custom_call.1} parent=15 // pred_check
          %p251 = pneg %p101
        $region26: #{tpu_custom_call.1} parent=15 // pred_check_branch
          %253 = sbr.rel (%p251) target = $region28
        $region27: #{tpu_custom_call.1} parent=15 // pred_region
          %p254 = scmp.lt.s32.totalorder %s22, 1
          %s255 = scalar_select %p254, %s22, 1
          %s256 = smul.addr %s255, 2
          %s257 = smul.addr %s256, 4
          %s258 = scalar_lea.vmem %s2, %s257
        $region28: #{tpu_custom_call.1} parent=15 // pred_fallthru
          _
        // Predicated region
        $region29: #{tpu_custom_call.1} parent=15 // pred_check
          %p259 = pneg %p127
        $region30: #{tpu_custom_call.1} parent=15 // pred_check_branch
          %261 = sbr.rel (%p259) target = $region32
        $region31: #{tpu_custom_call.1} parent=15 // pred_region
          %p262 = scmp.lt.s32.totalorder %s22, 1
          %s263 = scalar_select %p262, %s22, 1
          %s264 = scalar_lea.vmem %s3, %s263
        $region32: #{tpu_custom_call.1} parent=15 // pred_fallthru
          _
        // Predicated region
        $region33: #{tpu_custom_call.1} parent=15 // pred_check
          %p265 = pneg %p153
        $region34: #{tpu_custom_call.1} parent=15 // pred_check_branch
          %267 = sbr.rel (%p265) target = $region36
        $region35: #{tpu_custom_call.1} parent=15 // pred_region
          %p268 = scmp.lt.s32.totalorder %s22, 1
          %s269 = scalar_select %p268, %s22, 1
          %s270 = smul.addr %s269, 4
          %s271 = smul.addr %s270, 4
          %s272 = scalar_lea.vmem %s4, %s271
        $region36: #{tpu_custom_call.1} parent=15 // pred_fallthru
          _
        // Predicated region
        $region37: #{tpu_custom_call.1} parent=15 // pred_check
          %p273 = pneg %p179
        $region38: #{tpu_custom_call.1} parent=15 // pred_check_branch
          %275 = sbr.rel (%p273) target = $region40
        $region39: #{tpu_custom_call.1} parent=15 // pred_region
          %p276 = scmp.lt.s32.totalorder %s22, 1
          %s277 = scalar_select %p276, %s22, 1
          %s278 = scalar_lea.vmem %s5, %s277
        $region40: #{tpu_custom_call.1} parent=15 // pred_fallthru
          _
      $region16: #{tpu_custom_call.1} parent=5 // pred_fallthru
        _
      %p279 = scmp.le.s32.totalorder 1, %s15
      %p280 = scmp.lt.s32.totalorder %s15, 3
      %p281 = pnand %p279, %p280
      %p282 = pneg %p281
      // Predicated region
      $region41: #{tpu_custom_call.1} parent=5 // pred_check
        _
      $region42: #{tpu_custom_call.1} parent=5 // pred_check_branch
        %284 = sbr.rel (%p281) target = $region44
      $region43: #{tpu_custom_call.1} parent=5 // pred_region
        %s285 = ssub.s32 %s15, 1
        %s286 = smul.u32 4, %s25
        %p287 = scmp.lt.s32.totalorder %s24, 1
        %s288 = scalar_select %p287, %s24, 1
        %p289 = scmp.lt.s32.totalorder %s286, 3
        %s290 = scalar_select %p289, %s286, 3
        %s291 = smul.addr %s288, 4
        %s292 = sadd.s32 %s290, %s291
        %s293 = smul.addr %s292, 4
        %s294 = scalar_lea.vmem %s0, %s293
        %p295 = pneg %p55
        %p296 = pneg %p52
        %p297 = scmp.lt.s32.totalorder %s24, 1
        %s298 = scalar_select %p297, %s24, 1
        %s299 = scalar_lea.vmem %s1, %s298
        %p300 = pneg %p81
        %p301 = pneg %p78
        %p302 = scmp.lt.s32.totalorder %s24, 1
        %s303 = scalar_select %p302, %s24, 1
        %s304 = smul.addr %s303, 2
        %s305 = smul.addr %s304, 4
        %s306 = scalar_lea.vmem %s2, %s305
        %p307 = pneg %p107
        %p308 = pneg %p104
        %p309 = scmp.lt.s32.totalorder %s24, 1
        %s310 = scalar_select %p309, %s24, 1
        %s311 = scalar_lea.vmem %s3, %s310
        %p312 = pneg %p133
        %p313 = pneg %p130
        %p314 = scmp.lt.s32.totalorder %s24, 1
        %s315 = scalar_select %p314, %s24, 1
        %s316 = smul.addr %s315, 4
        %s317 = smul.addr %s316, 4
        %s318 = scalar_lea.vmem %s4, %s317
        %p319 = pneg %p159
        %p320 = pneg %p156
        %p321 = scmp.lt.s32.totalorder %s24, 1
        %s322 = scalar_select %p321, %s24, 1
        %s323 = scalar_lea.vmem %s5, %s322
        %p324 = pneg %p185
        %p325 = pneg %p182
        %p326 = pneg %p213
        %p327 = pneg %p210
        %s328 = sand.u32 %s200, 1
        %s329 = scalar_lea.sflag [#allocation3], %s328
        %s330 = sand.u32 %s200, 1
        %s331 = smul.addr %s330, 32
        %s332 = scalar_lea.vmem [#allocation2], %s331
        %s333 = smul.u32 4, %s25
        %p334 = scmp.lt.s32.totalorder %s24, 1
        %s335 = scalar_select %p334, %s24, 1
        %p336 = scmp.lt.s32.totalorder %s333, 3
        %s337 = scalar_select %p336, %s333, 3
        %s338 = smul.addr %s335, 4
        %s339 = sadd.s32 %s337, %s338
        %s340 = smul.addr %s339, 4
        %s341 = scalar_lea.vmem %s0, %s340
        %s342 = smul.u32 4, %s25
        %p343 = scmp.lt.s32.totalorder %s24, 1
        %s344 = scalar_select %p343, %s24, 1
        %s345 = scalar_lea.vmem %s1, %s344
        %p346 = scmp.lt.s32.totalorder %s24, 1
        %s347 = scalar_select %p346, %s24, 1
        %s348 = smul.addr %s347, 2
        %s349 = smul.addr %s348, 4
        %s350 = scalar_lea.vmem %s2, %s349
        %p351 = scmp.lt.s32.totalorder %s24, 1
        %s352 = scalar_select %p351, %s24, 1
        %s353 = scalar_lea.vmem %s3, %s352
        %p354 = scmp.lt.s32.totalorder %s24, 1
        %s355 = scalar_select %p354, %s24, 1
        %s356 = smul.addr %s355, 4
        %s357 = smul.addr %s356, 4
        %s358 = scalar_lea.vmem %s4, %s357
        %p359 = scmp.lt.s32.totalorder %s24, 1
        %s360 = scalar_select %p359, %s24, 1
        %s361 = scalar_lea.vmem %s5, %s360
        %s362 = smul.u32 4, %s25
        %v364 = vld [vmem:[%s345] sm:$0x1]
        %v365 = vld [vmem:[%s341] sm:$0xf]
        %v366 = vld [vmem:[%s341 + $0x4] sm:$0xf]
        %v367 = vld [vmem:[%s341 + $0x8] sm:$0xf]
        %v368 = vld [vmem:[%s341 + $0xc] sm:$0xf]
        %v369 = vunpack.c.l.bf16 %v365
        %v370 = vunpack.c.l.bf16 %v366
        %v371 = vunpack.c.l.bf16 %v367
        %v372 = vunpack.c.l.bf16 %v368
        %vm373 = vcmp.lt.f32.partialorder %v364, 0.0
        %375 = vset.pattern.permute.xlu0 9
        %376 = vperm.xlu0 %375, %v369
        %v377 = vpop.permute.xlu0 %376
        %380 = vset.pattern.permute.xlu0 9
        %381 = vperm.xlu0 %380, %v370
        %v382 = vpop.permute.xlu0 %381
        %385 = vset.pattern.permute.xlu0 9
        %386 = vperm.xlu0 %385, %v371
        %v387 = vpop.permute.xlu0 %386
        %390 = vset.pattern.permute.xlu0 9
        %391 = vperm.xlu0 %390, %v372
        %v392 = vpop.permute.xlu0 %391
        %v395 = vlaneseq
        %v396 = vshrl.u32 %v395, 7
        %v397 = vsub.s32 0, %v396
        %v398 = vrot.slane %v364, %v397
        %vm400 = vcmp.eq.f32.partialorder %v377, %v398
        %vm401 = vcmp.eq.f32.partialorder %v382, %v398
        %vm402 = vcmp.eq.f32.partialorder %v387, %v398
        %vm403 = vcmp.eq.f32.partialorder %v392, %v398
        %v404 = vsel %vm373, 1, 0
        %v405 = vlaneseq
        %v406 = vshrl.u32 %v405, 7
        %v407 = vsub.s32 0, %v406
        %v408 = vrot.slane %v404, %v407
        %vm409 = vcmp.eq.s32.totalorder %v408, 1
        %vm410 = vmor %vm409, %vm400
        %vm411 = vmor %vm409, %vm401
        %vm412 = vmor %vm409, %vm402
        %vm413 = vmor %vm409, %vm403
        %vm414 = vmpackc.low %vm410, %vm410
        %vm415 = vmpackc.low %vm411, %vm411
        %vm416 = vmpackc.low %vm412, %vm412
        %vm417 = vmpackc.low %vm413, %vm413
        %v418 = vsel %vm414, %v365, 0
        %v419 = vsel %vm415, %v366, 0
        %v420 = vsel %vm416, %v367, 0
        %v421 = vsel %vm417, %v368, 0
        %v422 = vld [vmem:[%s350] sm:$0xf]
        %v423 = vld [vmem:[%s350 + $0x4] sm:$0x1]
        %v424 = vld [vmem:[%s353] sm:$0x1]
        %v426 = vlaneseq
        %v427 = vshrl.u32 %v426, 7
        %v428 = vsub.s32 0, %v427
        %v429 = vrot.slane %v424, %v428
        %v435 = vunpack.c.l.b16 %v418
        %v436 = vunpack.c.l.b16 %v419
        %v437 = vunpack.c.l.b16 %v420
        %v438 = vunpack.c.l.b16 %v421
        %v439 = vpack.c.b16 %v436, %v435
        %v440 = vpack.c.b16 %v438, %v437
        %v443 = vunpack.c.l.b16 %v422
        %v444 = vunpack.c.l.b16 %v423
        %v445 = vpack.c.b16 %v444, %v443
        %vm446 = vcmask 72704
        %v448 = vsel %vm446, %v439, 0
        %v451 = vsel %vm446, %v440, 0
        %vm453 = vcmask 1043456
        %vm454 = vcmask 1044480
        %v455 = vsel %vm453, 4294967295, 65535
        %v456 = vsel %vm454, %v455, 0
        %v458 = vand.u32 %v445, %v456
        %460 = vmatprep.subr.bf16.mxu0 0
        %461 = vmatpush1.bf16.msra.mxu0 0
        %462 = vmatprep.subr.bf16.mxu0 0
        %463 = vmatpush1.bf16.msra.mxu0 0
        %464 = vmatprep.subr.bf16.mxu0 0
        %465 = vmatpush1.bf16.msra.mxu0 0
        %466 = vmatprep.subr.bf16.mxu0 0
        %467 = vmatpush1.bf16.msra.mxu0 0
        %468 = vmatprep.subr.bf16.mxu0 0
        %469 = vmatpush1.bf16.msra.mxu0 0
        %470 = vmatprep.subr.bf16.mxu0 0
        %471 = vmatpush1.bf16.msra.mxu0 0
        %472 = vmatprep.subr.bf16.mxu0 0
        %473 = vmatpush1.bf16.msra.mxu0 0
        %474 = vmatprep.subr.bf16.mxu0 0
        %475 = vmatpush1.bf16.msra.mxu0 %v458
        %476 = vmatprep.subr.bf16.mxu0 0
        %477 = vmatpush2.bf16.msra.mxu0 0
        %478 = vmatprep.subr.bf16.mxu0 0
        %479 = vmatpush2.bf16.msra.mxu0 0
        %480 = vmatprep.subr.bf16.mxu0 0
        %481 = vmatpush2.bf16.msra.mxu0 0
        %482 = vmatprep.subr.bf16.mxu0 0
        %483 = vmatpush2.bf16.msra.mxu0 0
        %484 = vmatprep.subr.bf16.mxu0 0
        %485 = vmatpush2.bf16.msra.mxu0 0
        %486 = vmatprep.subr.bf16.mxu0 0
        %487 = vmatpush2.bf16.msra.mxu0 0
        %488 = vmatprep.subr.bf16.mxu0 0
        %489 = vmatpush2.bf16.msra.mxu0 0
        %490 = vmatprep.subr.bf16.mxu0 0
        %491 = vmatpush2.bf16.msra.mxu0 0
        %492 = vmatprep.mubr.bf16.mxu0 0
        %493 = vmatmul.mubr.bf16.gmra.mxu0 %v448
        %v494 = vpop.f32.mrf.mxu0
        %v495 = vadd.f32 %v429, %v494
        %v496 = vpop.f32.mrf.mxu0
        %v497 = vpop.f32.mrf.mxu0
        %v498 = vadd.f32 %v429, %v497
        %v499 = vpop.f32.mrf.mxu0
        %500 = vmatprep.mubr.bf16.mxu0 0
        %501 = vmatmul.mubr.bf16.gmra.mxu0 %v451
        %v502 = vpop.f32.mrf.mxu0
        %v503 = vadd.f32 %v429, %v502
        %v504 = vpop.f32.mrf.mxu0
        %v505 = vpop.f32.mrf.mxu0
        %v506 = vadd.f32 %v429, %v505
        %v507 = vpop.f32.mrf.mxu0
        %508 = vdwg.mxu0
        %v509 = vmax.f32 %v495, 0.0
        %v510 = vmax.f32 %v498, 0.0
        %v511 = vmax.f32 %v503, 0.0
        %v512 = vmax.f32 %v506, 0.0
        %v513 = vpack.c.bf16 %v510, %v509
        %v514 = vpack.c.bf16 %v512, %v511
        %v515 = vld [vmem:[%s358] sm:$0xf]
        %v516 = vld [vmem:[%s358 + $0x4] sm:$0xf]
        %v517 = vld [vmem:[%s358 + $0x8] sm:$0xf]
        %v518 = vld [vmem:[%s358 + $0xc] sm:$0xf]
        %v519 = vld [vmem:[%s361] sm:$0x1]
        %v521 = vlaneseq
        %v522 = vshrl.u32 %v521, 7
        %v523 = vsub.s32 0, %v522
        %v524 = vrot.slane %v519, %v523
        %v530 = vunpack.c.l.b16 %v515
        %v531 = vunpack.c.l.b16 %v516
        %v532 = vunpack.c.l.b16 %v517
        %v533 = vunpack.c.l.b16 %v518
        %v534 = vpack.c.b16 %v531, %v530
        %v535 = vpack.c.b16 %v533, %v532
        %vm538 = vcmask 261120
        %v540 = vsel %vm538, %v513, 0
        %v543 = vsel %vm538, %v514, 0
        %545 = vmatprep.subr.bf16.mxu0 0
        %546 = vmatpush1.bf16.msra.mxu0 0
        %547 = vmatprep.subr.bf16.mxu0 0
        %548 = vmatpush1.bf16.msra.mxu0 0
        %549 = vmatprep.subr.bf16.mxu0 0
        %550 = vmatpush1.bf16.msra.mxu0 0
        %551 = vmatprep.subr.bf16.mxu0 0
        %552 = vmatpush1.bf16.msra.mxu0 0
        %553 = vmatprep.subr.bf16.mxu0 0
        %554 = vmatpush1.bf16.msra.mxu0 0
        %555 = vmatprep.subr.bf16.mxu0 0
        %556 = vmatpush1.bf16.msra.mxu0 0
        %557 = vmatprep.subr.bf16.mxu0 0
        %558 = vmatpush1.bf16.msra.mxu0 %v535
        %559 = vmatprep.subr.bf16.mxu0 0
        %560 = vmatpush1.bf16.msra.mxu0 %v534
        %561 = vmatprep.subr.bf16.mxu0 0
        %562 = vmatpush2.bf16.msra.mxu0 0
        %563 = vmatprep.subr.bf16.mxu0 0
        %564 = vmatpush2.bf16.msra.mxu0 0
        %565 = vmatprep.subr.bf16.mxu0 0
        %566 = vmatpush2.bf16.msra.mxu0 0
        %567 = vmatprep.subr.bf16.mxu0 0
        %568 = vmatpush2.bf16.msra.mxu0 0
        %569 = vmatprep.subr.bf16.mxu0 0
        %570 = vmatpush2.bf16.msra.mxu0 0
        %571 = vmatprep.subr.bf16.mxu0 0
        %572 = vmatpush2.bf16.msra.mxu0 0
        %573 = vmatprep.subr.bf16.mxu0 0
        %574 = vmatpush2.bf16.msra.mxu0 0
        %575 = vmatprep.subr.bf16.mxu0 0
        %576 = vmatpush2.bf16.msra.mxu0 0
        %577 = vmatprep.mubr.bf16.mxu0 0
        %578 = vmatmul.mubr.bf16.gmra.mxu0 %v540
        %v579 = vpop.f32.mrf.mxu0
        %v580 = vadd.f32 %v524, %v579
        %v581 = vpop.f32.mrf.mxu0
        %v582 = vpop.f32.mrf.mxu0
        %v583 = vadd.f32 %v524, %v582
        %v584 = vpop.f32.mrf.mxu0
        %585 = vmatprep.mubr.bf16.mxu0 0
        %586 = vmatmul.mubr.bf16.gmra.mxu0 %v543
        %v587 = vpop.f32.mrf.mxu0
        %v588 = vadd.f32 %v524, %v587
        %v589 = vpop.f32.mrf.mxu0
        %v590 = vpop.f32.mrf.mxu0
        %v591 = vadd.f32 %v524, %v590
        %v592 = vpop.f32.mrf.mxu0
        %593 = vdwg.mxu0
        %vm594 = vcmask 523264
        %595 = vst.msk [vmem:[%s332] sm:$0xff] %vm594, %v580
        %596 = vst.msk [vmem:[%s332 + $0x8] sm:$0xff] %vm594, %v583
        %597 = vst.msk [vmem:[%s332 + $0x10] sm:$0xff] %vm594, %v588
        %598 = vst.msk [vmem:[%s332 + $0x18] sm:$0xff] %vm594, %v591
        %s599 = sand.u32 %s200, 1
        %s600 = scalar_lea.sflag [#allocation3], %s599
        %s601 = sand.u32 %s200, 1
        %s602 = smul.addr %s601, 32
        %s603 = scalar_lea.vmem [#allocation2], %s602
        // Predicated region
        $region45: #{tpu_custom_call.1} parent=43 // pred_check
          %p604 = pneg %p210
        $region46: #{tpu_custom_call.1} parent=43 // pred_check_branch
          %606 = sbr.rel (%p604) target = $region48
        $region47: #{tpu_custom_call.1} parent=43 // pred_region
          %s607 = smul.u32 4, %s25
          %s609 = ssub.s32 512, 512
          %610 = vsyncadd %s600, %s609
          %s611 = smul.addr %s24, 4
          %s612 = sadd.s32 %s607, %s611
          %s613 = smul.addr %s612, 128
          %s614 = scalar_lea.hbm %s6, %s613
          %s615 = sshll.u32 %s603, 4
          %s616 = int_to_ptr.vmem [resolvable:$true] %s615
          %621 = dma.vmem_to_hbm [thread:$0]  %s616, 512, %s614, %s600, 128, 128, 8
        $region48: #{tpu_custom_call.1} parent=43 // pred_fallthru
          _
      $region44: #{tpu_custom_call.1} parent=5 // pred_fallthru
        _
      %p622 = scmp.le.s32.totalorder 2, %s15
      // Predicated region
      $region49: #{tpu_custom_call.1} parent=5 // pred_check
        %p623 = pneg %p622
      $region50: #{tpu_custom_call.1} parent=5 // pred_check_branch
        %625 = sbr.rel (%p623) target = $region52
      $region51: #{tpu_custom_call.1} parent=5 // pred_region
        %s626 = ssub.s32 %s15, 2
        // Predicated region
        $region53: #{tpu_custom_call.1} parent=51 // pred_check
          %p627 = pneg %p216
        $region54: #{tpu_custom_call.1} parent=51 // pred_check_branch
          %629 = sbr.rel (%p627) target = $region56
        $region55: #{tpu_custom_call.1} parent=51 // pred_region
          %s630 = sand.u32 %s201, 1
          %s631 = scalar_lea.sflag [#allocation3], %s630
          %s632 = sand.u32 %s201, 1
          %s633 = smul.addr %s632, 32
          %s634 = scalar_lea.vmem [#allocation2], %s633
          %635 = dma.done %s631, 512
        $region56: #{tpu_custom_call.1} parent=51 // pred_fallthru
          _
      $region52: #{tpu_custom_call.1} parent=5 // pred_fallthru
        _
    $region6: #{tpu_custom_call.1} parent=1 // loop_footer
      %s19 = sadd.s32 1, %s15
    $region7: #{tpu_custom_call.1} parent=1 // loop_footer_branch
      %14 = sbr.rel target = $region3
    $region8: #{tpu_custom_call.1} parent=1 // loop_exit
      _
    %636 = vsyncpa [#allocation3], 1
    %s637 = scalar_lea.sflag [#allocation3], 1
    %638 = vsyncpa %s637, 1

</llo_original>
